<compile_context>
chip_gen: v5e
topology: v5e:2x2
jax: 0.10.0
libtpu: 0.0.40
codegen_flags: <defaults>
</compile_context>

<pallas_src>
import math

import jax
import jax.numpy as jnp
from jax.experimental import pallas as pl
from jax.experimental.pallas import tpu as pltpu


def _logit(p: float) -> float:
    return math.log(p) - math.log(1.0 - p)


# ---------------------------------------------------------------------------
# Kernel: out = x * scale    (scale broadcast per sample)
# ---------------------------------------------------------------------------
def _operation_kernel(scale_ref, x_ref, o_ref):
    # scale_ref: (bt, 1, 1) f32 VMEM; x_ref / o_ref: (bt, ct, lt)
    x = x_ref[...]
    s = scale_ref[...]
    if x.dtype == s.dtype:
        o_ref[...] = x * s                                   # native-dtype multiply
    else:
        o_ref[...] = (x.astype(jnp.float32) * s).astype(o_ref.dtype)


# ---------------------------------------------------------------------------
# Hardware queries (robust fallbacks: never fail the run)
# ---------------------------------------------------------------------------
def _tpu_vmem_info():
    """Returns (scoped VMEM limit to request, physical VMEM capacity)."""
    phys = 64 << 20                       # conservative default (v7x per-TC)
    try:
        phys = int(pltpu.get_tpu_info().vmem_capacity_bytes)
    except Exception:
        pass
    # Request at most ~half of physical VMEM, never more than 64 MiB:
    #   v5e/v6e (128 MiB physical) -> 64 MiB limit; v7x (64 MiB) -> 32 MiB.
    return min(phys // 2, 64 << 20), phys


def _num_tensorcores():
    try:
        info = pltpu.get_tpu_info()
        for name in ("num_cores", "core_count", "num_tensorcores", "tensorcore_count"):
            v = getattr(info, name, None)
            if isinstance(v, int) and v > 0:
                return v
    except Exception:
        pass
    try:
        v = getattr(jax.devices()[0], "num_cores", None)
        if isinstance(v, int) and v > 0:
            return v
    except Exception:
        pass
    return 1


# ---------------------------------------------------------------------------
# Tiling: budget-driven, contiguity-preserving
# ---------------------------------------------------------------------------
def _choose_tiling(BS, C, L, itemsize, tile_bytes, num_cores):
    """Pick a (bt, ct, lt) block for a (BS, C, L) array.

    Block-shape rules honored: second-to-last dim (ct) is a multiple of 8 or
    the full C; last dim (lt) is a multiple of 128 or the full L; leading bt
    is unconstrained (just a divisor of BS).
    """
    per_sample = C * L * itemsize

    if per_sample <= tile_bytes:
        # Multi-sample tiles of full (C, L) slabs: fully contiguous HBM DMAs.
        cap = max(1, tile_bytes // per_sample)
        divs = [b for b in range(1, BS + 1) if BS % b == 0]
        feas = [b for b in divs if b <= cap] or [1]
        bt = max(feas)                      # single-TC chips: no forced split
        if num_cores > 1:
            # Prefer a grid step count that splits evenly across TensorCores.
            even = [b for b in feas if (BS // b) % num_cores == 0]
            if even:
                bt = max(even)
            else:
                multi = [b for b in feas if BS // b >= num_cores]
                if multi:
                    bt = max(multi)
        return bt, C, L

    # A single sample exceeds the tile budget: split the sample itself.
    # Prefer splitting C (keeps full-L rows -> contiguous ct*L slabs per sample).
    ct_opts = [c for c in range(8, C, 8)
               if C % c == 0 and c * L * itemsize <= tile_bytes]
    if ct_opts:
        return 1, max(ct_opts), L

    # Fall back to lane-dense L tiles (multiples of 128).
    if L % 128 == 0:
        lt_opts = [l for l in range(128, L, 128)
                   if L % l == 0 and C * l * itemsize <= tile_bytes]
        if lt_opts:
            return 1, C, max(lt_opts)

    # Awkward shape: whole sample per step (caller raises the VMEM limit).
    return 1, C, L


# ---------------------------------------------------------------------------
# Wrapper
# ---------------------------------------------------------------------------
def operation_forward(x, label, magnitude, prob_logits, key, *,
                      training=False, temperature=0.1):
    BS, C, L = x.shape
    label = label.astype(jnp.int32)
    prob_logits = jnp.asarray(prob_logits, jnp.float32)
    magnitude = jnp.asarray(magnitude, jnp.float32)

    # ---- get_mask(): per-sample scalar sampling (tiny glue, BS values) ----
    if training:
        # RelaxedBernoulli(temperature, prob).rsample(), using the logits
        # directly (no sigmoid round-trip -> no saturation for large logits).
        u = jax.random.uniform(key, (BS,), minval=1e-6, maxval=1.0 - 1e-6)
        logistic_noise = jnp.log(u) - jnp.log1p(-u)
        mask = jax.nn.sigmoid((prob_logits[label] + logistic_noise) / temperature)
    else:
        # Bernoulli(prob).sample()
        prob = jax.nn.sigmoid(prob_logits)[label]
        u = jax.random.uniform(key, (BS,))
        mask = (u < prob).astype(jnp.float32)

    # ---- fold mask & magnitude[label] into one per-sample scale ----
    mag = magnitude[label]                                            # (BS,)
    scale = (mask * mag + (1.0 - mask)).reshape(BS, 1, 1).astype(jnp.float32)

    # ---- tiling derived from the VMEM budget ----
    vmem_limit, phys_vmem = _tpu_vmem_info()
    tile_bytes = vmem_limit // 5          # 2 bufs x (in + out) ~= 4x tile + slack
    num_cores = _num_tensorcores()
    itemsize = jnp.dtype(x.dtype).itemsize
    bt, ct, lt = _choose_tiling(BS, C, L, itemsize, tile_bytes, num_cores)

    # Guard: double-buffered footprint must fit the limit we request
    # (covers the whole-sample fallback for awkward shapes).
    tile_b = bt * ct * lt * itemsize
    needed = 4 * tile_b + (1 << 20)
    if needed > vmem_limit:
        vmem_limit = min(phys_vmem, needed)

    grid = (BS // bt, C // ct, L // lt)
    grid_spec = pl.GridSpec(
        grid=grid,
        in_specs=[
            pl.BlockSpec((bt, 1, 1), lambda b, c, l: (b, 0, 0)),    # per-sample scale
            pl.BlockSpec((bt, ct, lt), lambda b, c, l: (b, c, l)),  # x tile
        ],
        out_specs=pl.BlockSpec((bt, ct, lt), lambda b, c, l: (b, c, l)),
    )

    cost = pl.CostEstimate(
        flops=int(x.size),
        transcendentals=0,
        bytes_accessed=int(2 * x.size * itemsize + BS * 4),
    )

    return pl.pallas_call(
        _operation_kernel,
        out_shape=jax.ShapeDtypeStruct((BS, C, L), x.dtype),
        grid_spec=grid_spec,
        compiler_params=pltpu.CompilerParams(
            dimension_semantics=("parallel", "parallel", "parallel"),
            vmem_limit_bytes=int(vmem_limit),
        ),
        cost_estimate=cost,
    )(scale, x)


if __name__ == "__main__":
    key = jax.random.PRNGKey(0)
    kx, kl, km_eval, km_train = jax.random.split(key, 4)

    BS, C, L = 4, 8, 128
    num_classes = 2

    x = jax.random.normal(kx, (BS, C, L), dtype=jnp.float32)
    label = jax.random.randint(kl, (BS,), 0, num_classes, dtype=jnp.int32)

    # Deterministic "parameters" matching __init__:
    #   magnitude   = nn.Parameter(torch.Tensor(initial_magnitude))
    #   probability = logit(initial_probability)
    initial_magnitude = jnp.array([0.5, 0.8], dtype=jnp.float32)
    initial_probability = [0.9999999, 0.9999999]
    prob_logits = jnp.array([_logit(p) for p in initial_probability], dtype=jnp.float32)

    # ---- eval mode (Bernoulli mask) ----
    out_eval = operation_forward(x, label, initial_magnitude, prob_logits, km_eval,
                                 training=False, temperature=0.1)
    out_eval = jax.block_until_ready(out_eval)

    prob = jax.nn.sigmoid(prob_logits)[label]
    u = jax.random.uniform(km_eval, (BS,))
    mask_ref = (u < prob).astype(jnp.float32).reshape(BS, 1, 1)
    mag_ref = initial_magnitude[label].reshape(BS, 1, 1)
    ref_eval = mask_ref * (x * mag_ref) + (1.0 - mask_ref) * x

    assert out_eval.shape == (BS, C, L) and out_eval.dtype == jnp.float32
    assert jnp.allclose(out_eval, ref_eval, atol=1e-6), "eval-mode mismatch vs reference"

    # ---- train mode (RelaxedBernoulli mask, direct-logit path) ----
    temperature = 0.1
    out_train = operation_forward(x, label, initial_magnitude, prob_logits, km_train,
                                  training=True, temperature=temperature)
    out_train = jax.block_until_ready(out_train)

    u = jax.random.uniform(km_train, (BS,), minval=1e-6, maxval=1.0 - 1e-6)
    noise = jnp.log(u) - jnp.log1p(-u)
    mask_t = jax.nn.sigmoid((prob_logits[label] + noise) / temperature).reshape(BS, 1, 1)
    ref_train = mask_t * (x * mag_ref) + (1.0 - mask_t) * x
    assert jnp.allclose(out_train, ref_train, atol=1e-6), "train-mode mismatch vs reference"

    print("KERNEL_OK")
</pallas_src>

<mosaic_0001>
module attributes {stable_mosaic.version = 11 : i64} {
  func.func @_operation_kernel(%arg0: i32, %arg1: i32, %arg2: i32, %arg3: memref<4x1x1xf32, #tpu.memory_space<vmem>>, %arg4: memref<4x8x128xf32, #tpu.memory_space<vmem>>, %arg5: memref<4x8x128xf32, #tpu.memory_space<vmem>>) attributes {dimension_semantics = [#tpu.dimension_semantics<parallel>, #tpu.dimension_semantics<parallel>, #tpu.dimension_semantics<parallel>], iteration_bounds = array<i64: 1, 1, 1>, scalar_prefetch = 0 : i64, scratch_operands = 0 : i64, tpu.core_type = #tpu.core_type<tc>, window_params = [{transform_indices = @transform_0, window_bounds = array<i64: 4, 1, 1>}, {transform_indices = @transform_1, window_bounds = array<i64: 4, 8, 128>}, {transform_indices = @transform_2, window_bounds = array<i64: 4, 8, 128>}]} {
    %c0 = arith.constant 0 : index
    %c0_0 = arith.constant 0 : index
    %c0_1 = arith.constant 0 : index
    %0 = vector.load %arg4[%c0, %c0_0, %c0_1] : memref<4x8x128xf32, #tpu.memory_space<vmem>>, vector<4x8x128xf32>
    %c0_2 = arith.constant 0 : index
    %c0_3 = arith.constant 0 : index
    %c0_4 = arith.constant 0 : index
    %1 = vector.load %arg3[%c0_2, %c0_3, %c0_4] : memref<4x1x1xf32, #tpu.memory_space<vmem>>, vector<4x1x1xf32>
    %2 = vector.broadcast %1 : vector<4x1x1xf32> to vector<4x8x128xf32>
    %3 = arith.mulf %0, %2 : vector<4x8x128xf32>
    %c0_5 = arith.constant 0 : index
    %c0_6 = arith.constant 0 : index
    %c0_7 = arith.constant 0 : index
    %4 = vector.load %arg5[%c0_5, %c0_6, %c0_7] : memref<4x8x128xf32, #tpu.memory_space<vmem>>, vector<4x8x128xf32>
    tpu.vector_store %arg5[%c0_5, %c0_6, %c0_7], %3 {strides = array<i32>} : memref<4x8x128xf32, #tpu.memory_space<vmem>>, vector<4x8x128xf32>,
    return
  }
  func.func @transform_0(%arg0: i32, %arg1: i32, %arg2: i32) -> (i32, i32, i32) {
    %c0_i32 = arith.constant 0 : i32
    %c0_i32_0 = arith.constant 0 : i32
    %c0_i32_1 = arith.constant 0 : i32
    return %arg0, %c0_i32, %c0_i32_0 : i32, i32, i32
  }
  func.func @transform_1(%arg0: i32, %arg1: i32, %arg2: i32) -> (i32, i32, i32) {
    %c0_i32 = arith.constant 0 : i32
    return %arg0, %arg1, %arg2 : i32, i32, i32
  }
  func.func @transform_2(%arg0: i32, %arg1: i32, %arg2: i32) -> (i32, i32, i32) {
    %c0_i32 = arith.constant 0 : i32
    return %arg0, %arg1, %arg2 : i32, i32, i32
  }
}

</mosaic_0001>

<llo_original>
// kernel: tpu_custom_call.1
$region0: #{tpu_custom_call.1}
  #allocation0 [shape = 'u32[]', space=smem, size = 0x4, offset = 0x4, fixed_abs, tag = 'smem constant byte address 0x4 - core index']
  #allocation1 [shape = 'u32[72,128]{1,0:T(1,128)}', space=vmem, size = 0x9000, scoped, tag = 'internal scratch']
  %s0 = inlined_call_operand.vmem [shape: f32[4,1,1], index: 0, kind: input, shape index: {}]
  %s1 = inlined_call_operand.hbm [shape: f32[4,8,128], index: 1, kind: input, shape index: {}]
  %s2 = inlined_call_operand.hbm [shape: f32[4,8,128], index: 2, kind: output, shape index: {}]
  %s3 = sld [smem:[#allocation0]]
  $region22: #{tpu_custom_call.1} parent=0
    _
  %s5 = ssub.s32 1, %s3
  %s6 = scalar_select 0, %s5, %s3
  $region1: #{tpu_custom_call.1} parent=0
    #allocation2 [shape = 'u8[16384]{0}', space=vmem, size = 0x4000, scoped, tag = 'input window, operand 1, single buffered']
    #allocation3 [shape = 's32[1]{0}', space=sflag, size = 0x4, scoped, tag = 'scoped memory for tpu_custom_call.1']
    #allocation4 [shape = 's32[1]{0}', space=sflag, size = 0x4, scoped, tag = 'scoped memory for tpu_custom_call.1']
    #allocation5 [shape = 'u8[16384]{0}', space=vmem, size = 0x4000, scoped, tag = 'output window, operand 0, single buffered']
    %7 = vsyncpa [#allocation3], 0
    %8 = vsyncpa [#allocation4], 0
    // Predicated region
    $region2: #{tpu_custom_call.1} parent=1 // pred_check
      _
    $region3: #{tpu_custom_call.1} parent=1 // pred_check_branch
      %10 = sbr.rel (0) target = $region5
    $region4: #{tpu_custom_call.1} parent=1 // pred_region
      _
    $region5: #{tpu_custom_call.1} parent=1 // pred_fallthru
      _
    // Predicated region
    $region6: #{tpu_custom_call.1} parent=1 // pred_check
      _
    $region7: #{tpu_custom_call.1} parent=1 // pred_check_branch
      %12 = sbr.rel (0) target = $region9
    $region8: #{tpu_custom_call.1} parent=1 // pred_region
      %14 = vsyncadd [#allocation3], 0
      %s15 = sshll.u32 %s1, 4
      %s16 = int_to_ptr.hbm [resolvable:$true] %s15
      %s17 = sshll.u32 [#allocation2], 4
      %s18 = int_to_ptr.vmem [resolvable:$true] %s17
      %23 = dma.hbm_to_vmem [thread:$0]  %s16, 512, %s18, [#allocation3], 128, 128, 8
    $region9: #{tpu_custom_call.1} parent=1 // pred_fallthru
      _
    // Predicated region
    $region10: #{tpu_custom_call.1} parent=1 // pred_check
      _
    $region11: #{tpu_custom_call.1} parent=1 // pred_check_branch
      %25 = sbr.rel (0) target = $region13
    $region12: #{tpu_custom_call.1} parent=1 // pred_region
      %27 = dma.done [#allocation3], 512
    $region13: #{tpu_custom_call.1} parent=1 // pred_fallthru
      _
    %v28 = vld [vmem:[#allocation2] sm:$0xff]
    %v29 = vld [vmem:[#allocation2 + $0x8] sm:$0xff]
    %v30 = vld [vmem:[#allocation2 + $0x10] sm:$0xff]
    %v31 = vld [vmem:[#allocation2 + $0x18] sm:$0xff]
    %v32 = vld [vmem:[%s0] sm:$0x1]
    %v33 = vld [vmem:[%s0 + $0x1] sm:$0x1]
    %v34 = vld [vmem:[%s0 + $0x2] sm:$0x1]
    %v35 = vld [vmem:[%s0 + $0x3] sm:$0x1]
    %v40 = vperm.slane %v32, 0
    %v41 = vperm.slane %v33, 0
    %v42 = vperm.slane %v34, 0
    %v43 = vperm.slane %v35, 0
    %44 = vset.pattern.permute.xlu0 0
    %45 = vperm.xlu0 %44, %v40
    %v46 = vpop.permute.xlu0 %45
    %48 = vset.pattern.permute.xlu0 0
    %49 = vperm.xlu0 %48, %v41
    %v50 = vpop.permute.xlu0 %49
    %52 = vset.pattern.permute.xlu0 0
    %53 = vperm.xlu0 %52, %v42
    %v54 = vpop.permute.xlu0 %53
    %56 = vset.pattern.permute.xlu0 0
    %57 = vperm.xlu0 %56, %v43
    %v58 = vpop.permute.xlu0 %57
    %v60 = vmul.f32 %v28, %v46
    %v61 = vmul.f32 %v29, %v50
    %v62 = vmul.f32 %v30, %v54
    %v63 = vmul.f32 %v31, %v58
    %64 = vst [vmem:[#allocation5] sm:$0xff] %v60
    %65 = vst [vmem:[#allocation5 + $0x8] sm:$0xff] %v61
    %66 = vst [vmem:[#allocation5 + $0x10] sm:$0xff] %v62
    %67 = vst [vmem:[#allocation5 + $0x18] sm:$0xff] %v63
    // Predicated region
    $region14: #{tpu_custom_call.1} parent=1 // pred_check
      _
    $region15: #{tpu_custom_call.1} parent=1 // pred_check_branch
      %69 = sbr.rel (0) target = $region17
    $region16: #{tpu_custom_call.1} parent=1 // pred_region
      %71 = vsyncadd [#allocation4], 0
      %s72 = sshll.u32 [#allocation5], 4
      %s73 = int_to_ptr.vmem [resolvable:$true] %s72
      %s74 = sshll.u32 %s2, 4
      %s75 = int_to_ptr.hbm [resolvable:$true] %s74
      %80 = dma.vmem_to_hbm [thread:$0]  %s73, 512, %s75, [#allocation4], 128, 128, 8
    $region17: #{tpu_custom_call.1} parent=1 // pred_fallthru
      _
    // Predicated region
    $region18: #{tpu_custom_call.1} parent=1 // pred_check
      _
    $region19: #{tpu_custom_call.1} parent=1 // pred_check_branch
      %82 = sbr.rel (0) target = $region21
    $region20: #{tpu_custom_call.1} parent=1 // pred_region
      %84 = dma.done [#allocation4], 512
    $region21: #{tpu_custom_call.1} parent=1 // pred_fallthru
      _
    %85 = vsyncpa [#allocation3], 1
    %86 = vsyncpa [#allocation4], 1

</llo_original>
